<compile_context>
chip_gen: v7x
topology: tpu7x:2x2x1
jax: 0.10.0
libtpu: 0.0.40
codegen_flags: <defaults>
</compile_context>

<pallas_src>
import numpy as np
import jax
import jax.numpy as jnp
from jax.experimental import pallas as pl
from jax.experimental.pallas import tpu as pltpu


# -----------------------------------------------------------------------------
# Deterministic wigner_d_info glue (plain numpy / host-side precompute)
# -----------------------------------------------------------------------------
def _real_sh(l, pts):
    x, y, z = pts[:, 0], pts[:, 1], pts[:, 2]
    if l == 0:
        return np.ones((pts.shape[0], 1))
    if l == 1:
        return np.stack([y, z, x], axis=1)
    if l == 2:
        s3 = np.sqrt(3.0)
        return np.stack([s3 * x * y, s3 * y * z, 0.5 * (3.0 * z * z - 1.0),
                         s3 * x * z, 0.5 * s3 * (x * x - y * y)], axis=1)
    # TODO(synk): general-l real Wigner matrices (only l<=2 needed for this demo)
    raise NotImplementedError("l > 2 not supported in this synthetic setup")


def _wigner_real(l, rot):
    """Real-basis Wigner D^l(rot) via a deterministic least-squares fit."""
    rng = np.random.RandomState(0)
    pts = rng.randn(32, 3)
    pts /= np.linalg.norm(pts, axis=1, keepdims=True)
    b0 = _real_sh(l, pts)            # Y(r)
    b1 = _real_sh(l, pts @ rot.T)    # Y(R r)
    d_t, *_ = np.linalg.lstsq(b0, b1, rcond=None)
    return d_t.T


def wigner_d_info(irreps):
    ms, flip = [], []
    off = 0
    for l in irreps:
        d = 2 * l + 1
        for k in range(d):
            ms.append(k - l)
            flip.append(off + (2 * l - k))   # index of the -m component
        off += d
    dim = off
    m = np.asarray(ms, np.int32)
    flip = np.asarray(flip, np.int32)

    rx_p = np.array([[1., 0., 0.], [0., 0., -1.], [0., 1., 0.]])  # R_x(+pi/2)
    rx_m = rx_p.T                                                 # R_x(-pi/2)

    def blockdiag(rot):
        mat = np.zeros((dim, dim), np.float32)
        o = 0
        for l in irreps:
            d = 2 * l + 1
            mat[o:o + d, o:o + d] = _wigner_real(l, rot)
            o += d
        return mat

    perm = np.zeros((dim, dim), np.float32)
    perm[np.arange(dim), flip] = 1.0   # (perm @ v)[i] == v[flip[i]]

    jm = blockdiag(rx_m)
    jp = blockdiag(rx_p)

    # Fold the flip permutation into constant matrices (host-side, exact):
    #   M1 = [J+ | J+P]                 so  J+ . Z(gamma) . x = M1 @ [c_g*x ; s_g[flip]*x]
    #   M2 = [[J-, J-P], [PJ-, PJ-P]]   so  [t4; P t4]        = M2 @ [c_b*t2 ; s_b[flip]*t2]
    m1 = np.concatenate([jp, jp @ perm], axis=1).astype(np.float32)          # (dim, 2dim)
    m2 = np.block([[jm, jm @ perm],
                   [perm @ jm, perm @ jm @ perm]]).astype(np.float32)        # (2dim, 2dim)

    return dict(dim=dim, m=m, flip=flip,
                Jm=jnp.asarray(jm), Jp=jnp.asarray(jp), P=jnp.asarray(perm),
                M1=jnp.asarray(m1), M2=jnp.asarray(m2))


def _z_coeffs(sincos, m, batch):
    """Per-feature cos / sin coefficients of the sparse z-rotation."""
    dim = m.shape[0]
    if sincos is None:                       # Optional[...] -> identity rotation
        return (jnp.ones((batch, dim), jnp.float32),
                jnp.zeros((batch, dim), jnp.float32))
    am = np.abs(m)
    sg = np.sign(m).astype(np.float32)
    c = sincos[:, am, 1]                     # cos(|m| * theta)
    s = -sg[None, :] * sincos[:, am, 0]      # -sign(m) * sin(|m| * theta)
    return c.astype(jnp.float32), s.astype(jnp.float32)


# -----------------------------------------------------------------------------
# Pallas kernel: one (dim, TN) lane-dense slab (TN = tile of batch*channels)
# -----------------------------------------------------------------------------
def _wigner_kernel(x_ref, cs_ref, m1_ref, m2_ref, o_ref):
    dim = x_ref.shape[0]
    x = x_ref[...].astype(jnp.float32)       # (dim, TN)

    c_g = cs_ref[0]                          # cos(gamma)            (dim, TN)
    s_gf = cs_ref[1]                         # sin-coeff(gamma)[flip]
    c_b = cs_ref[2]                          # cos(beta)
    s_bf = cs_ref[3]                         # sin-coeff(beta)[flip]
    c_a = cs_ref[4]                          # cos(alpha)
    s_a = cs_ref[5]                          # sin-coeff(alpha)

    # stage 1: t2 = J+ . Z(gamma) . x        (flip folded into M1 = [J+ | J+P])
    u = jnp.concatenate([c_g * x, s_gf * x], axis=0)                  # (2dim, TN)
    t2 = jnp.dot(m1_ref[...], u, preferred_element_type=jnp.float32)  # (dim, TN)

    # stage 2: [t4 ; P t4] = M2 @ [c_b*t2 ; s_b'*t2]
    v = jnp.concatenate([c_b * t2, s_bf * t2], axis=0)                # (2dim, TN)
    r = jnp.dot(m2_ref[...], v, preferred_element_type=jnp.float32)   # (2dim, TN)

    # stage 3: out = Z(alpha) t4 = c_a*t4 + s_a*(P t4)   (pure VPU)
    o_ref[...] = (c_a * r[:dim, :] + s_a * r[dim:, :]).astype(o_ref.dtype)


def sparse_wigner_rotation(x, sincos_alpha, sincos_beta, sincos_gamma, info,
                           *, lane_tile=256):
    batch, dim, ch = x.shape
    assert dim == info["dim"]
    m, flip = info["m"], info["flip"]

    # Per-batch z-rotation coefficients (B, dim); fold the flip into the inner sines.
    c_a, s_a = _z_coeffs(sincos_alpha, m, batch)
    c_b, s_b = _z_coeffs(sincos_beta, m, batch)
    c_g, s_g = _z_coeffs(sincos_gamma, m, batch)
    s_gf = s_g[:, flip]
    s_bf = s_b[:, flip]

    n = batch * ch

    # (6, B, dim) -> (6, dim, B) -> broadcast over channels -> (6, dim, B*C)
    cs = jnp.stack([c_g, s_gf, c_b, s_bf, c_a, s_a], axis=0)
    cs = jnp.transpose(cs, (0, 2, 1))
    cs = jnp.broadcast_to(cs[..., None], (6, dim, batch, ch)).reshape(6, dim, n)

    # Lane-dense feature slab: (dim, batch*channels); lane index = b*ch + c.
    x2 = jnp.transpose(x, (1, 0, 2)).reshape(dim, n).astype(jnp.float32)

    # Lane tile: multiple of 128 (v5e MXU/lane width), default 256 (v6e/v7x MXU width).
    tn = min(lane_tile, pl.cdiv(n, 128) * 128)
    n_pad = pl.cdiv(n, tn) * tn
    if n_pad != n:
        x2 = jnp.pad(x2, ((0, 0), (0, n_pad - n)))
        cs = jnp.pad(cs, ((0, 0), (0, 0), (0, n_pad - n)))

    out2 = pl.pallas_call(
        _wigner_kernel,
        out_shape=jax.ShapeDtypeStruct((dim, n_pad), jnp.float32),
        grid_spec=pltpu.PrefetchScalarGridSpec(
            num_scalar_prefetch=0,
            grid=(n_pad // tn,),
            in_specs=[
                pl.BlockSpec((dim, tn), lambda j: (0, j)),            # x slab
                pl.BlockSpec((6, dim, tn), lambda j: (0, 0, j)),      # cos/sin slabs
                # Constant folded J-matrices; tiny (dim x 2dim / 2dim x 2dim), so the
                # default double-buffering costs only a few KB of VMEM.
                pl.BlockSpec((dim, 2 * dim), lambda j: (0, 0)),
                pl.BlockSpec((2 * dim, 2 * dim), lambda j: (0, 0)),
            ],
            out_specs=pl.BlockSpec((dim, tn), lambda j: (0, j)),
        ),
        compiler_params=pltpu.CompilerParams(
            dimension_semantics=("parallel",)),
    )(x2, cs, info["M1"], info["M2"])

    out = out2[:, :n].reshape(dim, batch, ch).transpose(1, 0, 2)
    return out.astype(x.dtype)


# -----------------------------------------------------------------------------
if __name__ == "__main__":
    irreps = (0, 1, 1, 2)          # irreps.dim = 1 + 3 + 3 + 5 = 12
    info = wigner_d_info(irreps)
    dim = info["dim"]
    max_m = max(irreps)
    batch, channels = 16, 32       # batch*channels = 512 -> two 256-lane tiles

    key = jax.random.PRNGKey(0)
    kx, ka, kb, kg = jax.random.split(key, 4)
    x = jax.random.normal(kx, (batch, dim, channels), dtype=jnp.float32)
    alpha = jax.random.uniform(ka, (batch,), minval=0.0, maxval=2.0 * np.pi)
    beta = jax.random.uniform(kb, (batch,), minval=0.0, maxval=np.pi)
    gamma = jax.random.uniform(kg, (batch,), minval=0.0, maxval=2.0 * np.pi)

    def make_sincos(theta):
        mm = jnp.arange(max_m + 1, dtype=jnp.float32)
        ang = theta[:, None] * mm[None, :]
        return jnp.stack([jnp.sin(ang), jnp.cos(ang)], axis=-1)   # (B, max_m+1, 2)

    sc_a, sc_b, sc_g = make_sincos(alpha), make_sincos(beta), make_sincos(gamma)

    out = jax.block_until_ready(
        sparse_wigner_rotation(x, sc_a, sc_b, sc_g, info))

    # ---- pure-JAX dense reference (same info matrices) -----------------------
    def dense_z(c, s):
        idx = np.arange(dim)
        z = jnp.zeros((batch, dim, dim), jnp.float32)
        z = z.at[:, idx, idx].set(c)
        z = z.at[:, idx, info["flip"]].add(s)
        return z

    c_a, s_a = _z_coeffs(sc_a, info["m"], batch)
    c_b, s_b = _z_coeffs(sc_b, info["m"], batch)
    c_g, s_g = _z_coeffs(sc_g, info["m"], batch)
    d_full = jnp.einsum("bij,jk,bkl,lm,bmn->bin",
                        dense_z(c_a, s_a), info["Jm"],
                        dense_z(c_b, s_b), info["Jp"],
                        dense_z(c_g, s_g))
    ref = jnp.einsum("bij,bjc->bic", d_full, x)

    assert out.shape == x.shape and out.dtype == x.dtype
    np.testing.assert_allclose(np.asarray(out), np.asarray(ref),
                               rtol=1e-4, atol=1e-4)
    print("KERNEL_OK")
</pallas_src>

<mosaic_0001>
module attributes {stable_mosaic.version = 11 : i64} {
  func.func @_wigner_kernel(%arg0: i32, %arg1: memref<12x256xf32, #tpu.memory_space<vmem>>, %arg2: memref<6x12x256xf32, #tpu.memory_space<vmem>>, %arg3: memref<12x24xf32, #tpu.memory_space<vmem>>, %arg4: memref<24x24xf32, #tpu.memory_space<vmem>>, %arg5: memref<12x256xf32, #tpu.memory_space<vmem>>) attributes {dimension_semantics = [#tpu.dimension_semantics<parallel>], iteration_bounds = array<i64: 2>, scalar_prefetch = 0 : i64, scratch_operands = 0 : i64, tpu.core_type = #tpu.core_type<tc>, window_params = [{transform_indices = @transform_0, window_bounds = array<i64: 12, 256>}, {transform_indices = @transform_1, window_bounds = array<i64: 6, 12, 256>}, {pipeline_mode = #tpu.pipeline_mode<synchronous>, transform_indices = @transform_2, window_bounds = array<i64: 12, 24>}, {pipeline_mode = #tpu.pipeline_mode<synchronous>, transform_indices = @transform_3, window_bounds = array<i64: 24, 24>}, {transform_indices = @transform_4, window_bounds = array<i64: 12, 256>}]} {
    %c0 = arith.constant 0 : index
    %c0_0 = arith.constant 0 : index
    %0 = vector.load %arg1[%c0, %c0_0] : memref<12x256xf32, #tpu.memory_space<vmem>>, vector<12x256xf32>
    %c0_1 = arith.constant 0 : index
    %c0_2 = arith.constant 0 : index
    %c0_3 = arith.constant 0 : index
    %1 = vector.load %arg2[%c0_1, %c0_2, %c0_3] : memref<6x12x256xf32, #tpu.memory_space<vmem>>, vector<1x12x256xf32>
    %2 = vector.shape_cast %1 : vector<1x12x256xf32> to vector<12x256xf32>
    %c1 = arith.constant 1 : index
    %c0_4 = arith.constant 0 : index
    %c0_5 = arith.constant 0 : index
    %3 = vector.load %arg2[%c1, %c0_4, %c0_5] : memref<6x12x256xf32, #tpu.memory_space<vmem>>, vector<1x12x256xf32>
    %4 = vector.shape_cast %3 : vector<1x12x256xf32> to vector<12x256xf32>
    %c2 = arith.constant 2 : index
    %c0_6 = arith.constant 0 : index
    %c0_7 = arith.constant 0 : index
    %5 = vector.load %arg2[%c2, %c0_6, %c0_7] : memref<6x12x256xf32, #tpu.memory_space<vmem>>, vector<1x12x256xf32>
    %6 = vector.shape_cast %5 : vector<1x12x256xf32> to vector<12x256xf32>
    %c3 = arith.constant 3 : index
    %c0_8 = arith.constant 0 : index
    %c0_9 = arith.constant 0 : index
    %7 = vector.load %arg2[%c3, %c0_8, %c0_9] : memref<6x12x256xf32, #tpu.memory_space<vmem>>, vector<1x12x256xf32>
    %8 = vector.shape_cast %7 : vector<1x12x256xf32> to vector<12x256xf32>
    %c4 = arith.constant 4 : index
    %c0_10 = arith.constant 0 : index
    %c0_11 = arith.constant 0 : index
    %9 = vector.load %arg2[%c4, %c0_10, %c0_11] : memref<6x12x256xf32, #tpu.memory_space<vmem>>, vector<1x12x256xf32>
    %10 = vector.shape_cast %9 : vector<1x12x256xf32> to vector<12x256xf32>
    %c5 = arith.constant 5 : index
    %c0_12 = arith.constant 0 : index
    %c0_13 = arith.constant 0 : index
    %11 = vector.load %arg2[%c5, %c0_12, %c0_13] : memref<6x12x256xf32, #tpu.memory_space<vmem>>, vector<1x12x256xf32>
    %12 = vector.shape_cast %11 : vector<1x12x256xf32> to vector<12x256xf32>
    %13 = arith.mulf %2, %0 : vector<12x256xf32>
    %14 = arith.mulf %4, %0 : vector<12x256xf32>
    %15 = tpu.concatenate %13, %14 in 0 : vector<12x256xf32>, vector<12x256xf32> -> vector<24x256xf32>
    %c0_14 = arith.constant 0 : index
    %c0_15 = arith.constant 0 : index
    %16 = vector.load %arg3[%c0_14, %c0_15] : memref<12x24xf32, #tpu.memory_space<vmem>>, vector<12x24xf32>
    %cst = arith.constant dense<0.000000e+00> : vector<12x256xf32>
    %17 = tpu.matmul %16, %15, %cst {dimension_numbers = #tpu.dot_dimension_numbers<[1], [0], [0], [1], [0, 0, 1, 1], [], []>} : vector<12x24xf32>, vector<24x256xf32>, vector<12x256xf32> -> vector<12x256xf32>
    %18 = arith.mulf %6, %17 : vector<12x256xf32>
    %19 = arith.mulf %8, %17 : vector<12x256xf32>
    %20 = tpu.concatenate %18, %19 in 0 : vector<12x256xf32>, vector<12x256xf32> -> vector<24x256xf32>
    %c0_16 = arith.constant 0 : index
    %c0_17 = arith.constant 0 : index
    %21 = vector.load %arg4[%c0_16, %c0_17] : memref<24x24xf32, #tpu.memory_space<vmem>>, vector<24x24xf32>
    %cst_18 = arith.constant dense<0.000000e+00> : vector<24x256xf32>
    %22 = tpu.matmul %21, %20, %cst_18 {dimension_numbers = #tpu.dot_dimension_numbers<[1], [0], [0], [1], [0, 0, 1, 1], [], []>} : vector<24x24xf32>, vector<24x256xf32>, vector<24x256xf32> -> vector<24x256xf32>
    %23 = vector.extract_strided_slice %22 {offsets = [0, 0], sizes = [12, 256], strides = [1, 1]} : vector<24x256xf32> to vector<12x256xf32>
    %24 = arith.mulf %10, %23 : vector<12x256xf32>
    %25 = vector.extract_strided_slice %22 {offsets = [12, 0], sizes = [12, 256], strides = [1, 1]} : vector<24x256xf32> to vector<12x256xf32>
    %26 = arith.mulf %12, %25 : vector<12x256xf32>
    %27 = arith.addf %24, %26 : vector<12x256xf32>
    %c0_19 = arith.constant 0 : index
    %c0_20 = arith.constant 0 : index
    %28 = vector.load %arg5[%c0_19, %c0_20] : memref<12x256xf32, #tpu.memory_space<vmem>>, vector<12x256xf32>
    tpu.vector_store %arg5[%c0_19, %c0_20], %27 {strides = array<i32>} : memref<12x256xf32, #tpu.memory_space<vmem>>, vector<12x256xf32>,
    return
  }
  func.func @transform_0(%arg0: i32) -> (i32, i32) {
    %c0_i32 = arith.constant 0 : i32
    %c0_i32_0 = arith.constant 0 : i32
    return %c0_i32, %arg0 : i32, i32
  }
  func.func @transform_1(%arg0: i32) -> (i32, i32, i32) {
    %c0_i32 = arith.constant 0 : i32
    %c0_i32_0 = arith.constant 0 : i32
    %c0_i32_1 = arith.constant 0 : i32
    return %c0_i32, %c0_i32_0, %arg0 : i32, i32, i32
  }
  func.func @transform_2(%arg0: i32) -> (i32, i32) {
    %c0_i32 = arith.constant 0 : i32
    %c0_i32_0 = arith.constant 0 : i32
    %c0_i32_1 = arith.constant 0 : i32
    return %c0_i32, %c0_i32_0 : i32, i32
  }
  func.func @transform_3(%arg0: i32) -> (i32, i32) {
    %c0_i32 = arith.constant 0 : i32
    %c0_i32_0 = arith.constant 0 : i32
    %c0_i32_1 = arith.constant 0 : i32
    return %c0_i32, %c0_i32_0 : i32, i32
  }
  func.func @transform_4(%arg0: i32) -> (i32, i32) {
    %c0_i32 = arith.constant 0 : i32
    %c0_i32_0 = arith.constant 0 : i32
    return %c0_i32, %arg0 : i32, i32
  }
}

</mosaic_0001>

<llo_original>
// kernel: tpu_custom_call.1
$region0: #{tpu_custom_call.1}
  #allocation0 [shape = 'u32[]', space=smem, size = 0x4, offset = 0x4, fixed_abs, tag = 'smem constant byte address 0x4 - core index']
  #allocation1 [shape = 'u32[144,128]{1,0:T(1,128)}', space=vmem, size = 0x12000, scoped, tag = 'internal scratch']
  %s0 = inlined_call_operand.hbm [shape: f32[12,512], index: 0, kind: input, shape index: {}]
  %s1 = inlined_call_operand.hbm [shape: f32[6,12,512], index: 1, kind: input, shape index: {}]
  %s2 = inlined_call_operand.hbm [shape: f32[12,24], index: 2, kind: input, shape index: {}]
  %s3 = inlined_call_operand.hbm [shape: f32[24,24], index: 3, kind: input, shape index: {}]
  %s4 = inlined_call_operand.hbm [shape: f32[12,512], index: 4, kind: output, shape index: {}]
  %s5 = sld [smem:[#allocation0]]
  $region65: #{tpu_custom_call.1} parent=0
    _
  %s7 = ssub.s32 1, %s5
  %s8 = scalar_select 0, %s7, %s5
  $region1: #{tpu_custom_call.1} parent=0
    #allocation2 [shape = 'u8[32768]{0}', space=vmem, size = 0x8000, scoped, tag = 'input window, operand 0']
    #allocation3 [shape = 's32[2]{0}', space=sflag, size = 0x8, scoped, tag = 'scoped memory for tpu_custom_call.1']
    #allocation4 [shape = 's32[2]{0}', space=sflag, size = 0x8, scoped, tag = 'scoped memory for tpu_custom_call.1']
    #allocation5 [shape = 'u8[196608]{0}', space=vmem, size = 0x30000, scoped, tag = 'input window, operand 1']
    #allocation6 [shape = 's32[2]{0}', space=sflag, size = 0x8, scoped, tag = 'scoped memory for tpu_custom_call.1']
    #allocation7 [shape = 'u8[8192]{0}', space=vmem, size = 0x2000, scoped, tag = 'input window, operand 2, single buffered']
    #allocation8 [shape = 'u8[12288]{0}', space=vmem, size = 0x3000, scoped, tag = 'input window, operand 3, single buffered']
    #allocation9 [shape = 's32[1]{0}', space=sflag, size = 0x4, scoped, tag = 'scoped memory for tpu_custom_call.1']
    #allocation10 [shape = 'u8[32768]{0}', space=vmem, size = 0x8000, scoped, tag = 'output window, operand 0']
    %9 = vsyncpa [#allocation3], 0
    %s10 = scalar_lea.sflag [#allocation3], 1
    %11 = vsyncpa %s10, 0
    %12 = vsyncpa [#allocation6], 0
    %s13 = scalar_lea.sflag [#allocation6], 1
    %14 = vsyncpa %s13, 0
    %15 = vsyncpa [#allocation9], 0
    %16 = vsyncpa [#allocation4], 0
    %s17 = scalar_lea.sflag [#allocation4], 1
    %18 = vsyncpa %s17, 0
    loop: start=0, step=1, limit=4
    $region2: #{tpu_custom_call.1} parent=1 // loop_pre_header
      _
    $region3: #{tpu_custom_call.1} parent=1 // loop_header
      %s20 = sphi 0, %s24
      %p21 = scmp.ge.s32.totalorder %s20, 4
      %s30 = sphi 0, %s32
      %s33 = sphi 0, %s30
      %s34 = sphi 0, %s33
      %s50 = sphi 0, %s34
      %s56 = sphi 0, %s58
      %s59 = sphi 0, %s56
      %s60 = sphi 0, %s59
      %s76 = sphi 0, %s60
      %s80 = sphi 0, %s80
      %s82 = sphi 0, %s80
      %s83 = sphi 0, %s82
      %s97 = sphi 0, %s83
      %s101 = sphi 0, %s101
      %s103 = sphi 0, %s101
      %s104 = sphi 0, %s103
      %s118 = sphi 0, %s104
      %s124 = sphi 0, %s126
      %s127 = sphi 0, %s124
      %s128 = sphi 0, %s127
      %s144 = sphi 0, %s128
    $region4: #{tpu_custom_call.1} parent=1 // loop_header_branch
      %23 = sbr.rel (%p21) target = $region8
    $region5: #{tpu_custom_call.1} parent=1 // loop_body
      %s25 = ssub.s32 %s20, 1
      %s26 = ssub.s32 %s20, 2
      %s27 = sadd.s32 %s20, 1
      %s28 = ssub.s32 %s20, %s27
      %p29 = scmp.eq.s32.totalorder %s28, 0
      %s31 = sadd.s32 %s30, 1
      %s32 = scalar_select %p29, %s30, %s31
      %p35 = pneg %p29
      %p36 = scmp.eq.s32.totalorder %s20, 1
      %p37 = por %p35, %p36
      %p38 = scmp.ne.s32.totalorder %s30, %s33
      %p39 = scmp.eq.s32.totalorder %s20, 0
      %p40 = por %p38, %p39
      %p41 = scmp.ne.s32.totalorder %s30, %s33
      %p42 = scmp.eq.s32.totalorder %s25, 1
      %p43 = por %p41, %p42
      %p44 = scmp.ne.s32.totalorder %s33, %s34
      %p45 = scmp.eq.s32.totalorder %s25, 0
      %p46 = por %p44, %p45
      %p47 = scmp.ne.s32.totalorder %s33, %s34
      %p48 = scmp.eq.s32.totalorder %s26, 1
      %p49 = por %p47, %p48
      %p51 = scmp.ne.s32.totalorder %s34, %s50
      %p52 = scmp.eq.s32.totalorder %s26, 0
      %p53 = por %p51, %p52
      %s54 = ssub.s32 %s20, %s27
      %p55 = scmp.eq.s32.totalorder %s54, 0
      %s57 = sadd.s32 %s56, 1
      %s58 = scalar_select %p55, %s56, %s57
      %p61 = pneg %p55
      %p62 = scmp.eq.s32.totalorder %s20, 1
      %p63 = por %p61, %p62
      %p64 = scmp.ne.s32.totalorder %s56, %s59
      %p65 = scmp.eq.s32.totalorder %s20, 0
      %p66 = por %p64, %p65
      %p67 = scmp.ne.s32.totalorder %s56, %s59
      %p68 = scmp.eq.s32.totalorder %s25, 1
      %p69 = por %p67, %p68
      %p70 = scmp.ne.s32.totalorder %s59, %s60
      %p71 = scmp.eq.s32.totalorder %s25, 0
      %p72 = por %p70, %p71
      %p73 = scmp.ne.s32.totalorder %s59, %s60
      %p74 = scmp.eq.s32.totalorder %s26, 1
      %p75 = por %p73, %p74
      %p77 = scmp.ne.s32.totalorder %s60, %s76
      %p78 = scmp.eq.s32.totalorder %s26, 0
      %p79 = por %p77, %p78
      %s81 = sadd.s32 %s80, 1
      %p84 = scmp.eq.s32.totalorder %s20, 1
      %p85 = scmp.ne.s32.totalorder %s80, %s82
      %p86 = scmp.eq.s32.totalorder %s20, 0
      %p87 = por %p85, %p86
      %p88 = scmp.ne.s32.totalorder %s80, %s82
      %p89 = scmp.eq.s32.totalorder %s25, 1
      %p90 = por %p88, %p89
      %p91 = scmp.ne.s32.totalorder %s82, %s83
      %p92 = scmp.eq.s32.totalorder %s25, 0
      %p93 = por %p91, %p92
      %p94 = scmp.ne.s32.totalorder %s82, %s83
      %p95 = scmp.eq.s32.totalorder %s26, 1
      %p96 = por %p94, %p95
      %p98 = scmp.ne.s32.totalorder %s83, %s97
      %p99 = scmp.eq.s32.totalorder %s26, 0
      %p100 = por %p98, %p99
      %s102 = sadd.s32 %s101, 1
      %p105 = scmp.eq.s32.totalorder %s20, 1
      %p106 = scmp.ne.s32.totalorder %s101, %s103
      %p107 = scmp.eq.s32.totalorder %s20, 0
      %p108 = por %p106, %p107
      %p109 = scmp.ne.s32.totalorder %s101, %s103
      %p110 = scmp.eq.s32.totalorder %s25, 1
      %p111 = por %p109, %p110
      %p112 = scmp.ne.s32.totalorder %s103, %s104
      %p113 = scmp.eq.s32.totalorder %s25, 0
      %p114 = por %p112, %p113
      %p115 = scmp.ne.s32.totalorder %s103, %s104
      %p116 = scmp.eq.s32.totalorder %s26, 1
      %p117 = por %p115, %p116
      %p119 = scmp.ne.s32.totalorder %s104, %s118
      %p120 = scmp.eq.s32.totalorder %s26, 0
      %p121 = por %p119, %p120
      %s122 = ssub.s32 %s20, %s27
      %p123 = scmp.eq.s32.totalorder %s122, 0
      %s125 = sadd.s32 %s124, 1
      %s126 = scalar_select %p123, %s124, %s125
      %p129 = pneg %p123
      %p130 = scmp.eq.s32.totalorder %s20, 1
      %p131 = por %p129, %p130
      %p132 = scmp.ne.s32.totalorder %s124, %s127
      %p133 = scmp.eq.s32.totalorder %s20, 0
      %p134 = por %p132, %p133
      %p135 = scmp.ne.s32.totalorder %s124, %s127
      %p136 = scmp.eq.s32.totalorder %s25, 1
      %p137 = por %p135, %p136
      %p138 = scmp.ne.s32.totalorder %s127, %s128
      %p139 = scmp.eq.s32.totalorder %s25, 0
      %p140 = por %p138, %p139
      %p141 = scmp.ne.s32.totalorder %s127, %s128
      %p142 = scmp.eq.s32.totalorder %s26, 1
      %p143 = por %p141, %p142
      %p145 = scmp.ne.s32.totalorder %s128, %s144
      %p146 = scmp.eq.s32.totalorder %s26, 0
      %p147 = por %p145, %p146
      %p148 = scmp.le.s32.totalorder 1, %s20
      %p149 = scmp.lt.s32.totalorder %s20, 3
      %p150 = pnand %p148, %p149
      %p151 = pneg %p150
      // Predicated region
      $region9: #{tpu_custom_call.1} parent=5 // pred_check
        _
      $region10: #{tpu_custom_call.1} parent=5 // pred_check_branch
        %153 = sbr.rel (%p150) target = $region12
      $region11: #{tpu_custom_call.1} parent=5 // pred_region
        %s154 = ssub.s32 %s20, 1
        // Predicated region
        $region13: #{tpu_custom_call.1} parent=11 // pred_check
          %p155 = pneg %p93
        $region14: #{tpu_custom_call.1} parent=11 // pred_check_branch
          %157 = sbr.rel (%p155) target = $region16
        $region15: #{tpu_custom_call.1} parent=11 // pred_region
          %s159 = ssub.s32 256, 256
          %160 = vsyncadd [#allocation6], %s159
          %s161 = sshll.u32 [#allocation7], 4
          %s162 = int_to_ptr.vmem [resolvable:$true] %s161
          %167 = dma.hbm_to_vmem [thread:$0]  %s2, 256, %s162, [#allocation6], 128, 128, 8
        $region16: #{tpu_custom_call.1} parent=11 // pred_fallthru
          _
        // Predicated region
        $region17: #{tpu_custom_call.1} parent=11 // pred_check
          %p168 = pneg %p114
        $region18: #{tpu_custom_call.1} parent=11 // pred_check_branch
          %170 = sbr.rel (%p168) target = $region20
        $region19: #{tpu_custom_call.1} parent=11 // pred_region
          %s172 = ssub.s32 384, 384
          %173 = vsyncadd [#allocation9], %s172
          %s174 = sshll.u32 [#allocation8], 4
          %s175 = int_to_ptr.vmem [resolvable:$true] %s174
          %180 = dma.hbm_to_vmem [thread:$0]  %s3, 384, %s175, [#allocation9], 128, 128, 8
        $region20: #{tpu_custom_call.1} parent=11 // pred_fallthru
          _
      $region12: #{tpu_custom_call.1} parent=5 // pred_fallthru
        _
      %p181 = scmp.lt.s32.totalorder %s20, 2
      // Predicated region
      $region21: #{tpu_custom_call.1} parent=5 // pred_check
        %p182 = pneg %p181
      $region22: #{tpu_custom_call.1} parent=5 // pred_check_branch
        %184 = sbr.rel (%p182) target = $region24
      $region23: #{tpu_custom_call.1} parent=5 // pred_region
        // Predicated region
        $region25: #{tpu_custom_call.1} parent=23 // pred_check
          %p185 = pneg %p40
        $region26: #{tpu_custom_call.1} parent=23 // pred_check_branch
          %187 = sbr.rel (%p185) target = $region28
        $region27: #{tpu_custom_call.1} parent=23 // pred_region
          %s188 = sand.u32 %s30, 1
          %s189 = scalar_lea.sflag [#allocation3], %s188
          %s190 = sand.u32 %s30, 1
          %s191 = smul.addr %s190, 32
          %s192 = scalar_lea.vmem [#allocation2], %s191
          %s193 = smul.u32 2, %s20
          %s195 = ssub.s32 512, 512
          %196 = vsyncadd %s189, %s195
          %s197 = smul.addr %s193, 128
          %s198 = scalar_lea.hbm %s0, %s197
          %s199 = sshll.u32 %s192, 4
          %s200 = int_to_ptr.vmem [resolvable:$true] %s199
          %205 = dma.hbm_to_vmem [thread:$0]  %s198, 512, %s200, %s189, 512, 256, 16
        $region28: #{tpu_custom_call.1} parent=23 // pred_fallthru
          _
        // Predicated region
        $region29: #{tpu_custom_call.1} parent=23 // pred_check
          %p206 = pneg %p66
        $region30: #{tpu_custom_call.1} parent=23 // pred_check_branch
          %208 = sbr.rel (%p206) target = $region32
        $region31: #{tpu_custom_call.1} parent=23 // pred_region
          %s209 = sand.u32 %s20, 1
          %s210 = scalar_lea.sflag [#allocation6], %s209
          %s211 = sand.u32 %s56, 1
          %s212 = smul.addr %s211, 192
          %s213 = scalar_lea.vmem [#allocation5], %s212
          %s214 = smul.u32 2, %s20
          %s216 = ssub.s32 3072, 3072
          %217 = vsyncadd %s210, %s216
          %s218 = smul.addr %s214, 128
          %s219 = scalar_lea.hbm %s1, %s218
          %s220 = sshll.u32 %s213, 4
          %s221 = int_to_ptr.vmem [resolvable:$true] %s220
          %226 = dma.hbm_to_vmem [thread:$0]  %s219, 3072, %s221, %s210, 512, 256, 16
        $region32: #{tpu_custom_call.1} parent=23 // pred_fallthru
          _
      $region24: #{tpu_custom_call.1} parent=5 // pred_fallthru
        _
      %p227 = scmp.le.s32.totalorder 1, %s20
      %p228 = scmp.lt.s32.totalorder %s20, 3
      %p229 = pnand %p227, %p228
      %p230 = pneg %p229
      // Predicated region
      $region33: #{tpu_custom_call.1} parent=5 // pred_check
        _
      $region34: #{tpu_custom_call.1} parent=5 // pred_check_branch
        %232 = sbr.rel (%p229) target = $region36
      $region35: #{tpu_custom_call.1} parent=5 // pred_region
        %s233 = ssub.s32 %s20, 1
        %s234 = sand.u32 %s33, 1
        %s235 = scalar_lea.sflag [#allocation3], %s234
        %s236 = sand.u32 %s33, 1
        %s237 = smul.addr %s236, 32
        %s238 = scalar_lea.vmem [#allocation2], %s237
        // Predicated region
        $region37: #{tpu_custom_call.1} parent=35 // pred_check
          %p239 = pneg %p46
        $region38: #{tpu_custom_call.1} parent=35 // pred_check_branch
          %241 = sbr.rel (%p239) target = $region40
        $region39: #{tpu_custom_call.1} parent=35 // pred_region
          %242 = dma.done %s235, 512
        $region40: #{tpu_custom_call.1} parent=35 // pred_fallthru
          _
        %s243 = sand.u32 %s25, 1
        %s244 = scalar_lea.sflag [#allocation6], %s243
        %s245 = sand.u32 %s59, 1
        %s246 = smul.addr %s245, 192
        %s247 = scalar_lea.vmem [#allocation5], %s246
        // Predicated region
        $region41: #{tpu_custom_call.1} parent=35 // pred_check
          %p248 = pneg %p72
        $region42: #{tpu_custom_call.1} parent=35 // pred_check_branch
          %250 = sbr.rel (%p248) target = $region44
        $region43: #{tpu_custom_call.1} parent=35 // pred_region
          %251 = dma.done %s244, 3072
        $region44: #{tpu_custom_call.1} parent=35 // pred_fallthru
          _
        // Predicated region
        $region45: #{tpu_custom_call.1} parent=35 // pred_check
          %p252 = pneg %p93
        $region46: #{tpu_custom_call.1} parent=35 // pred_check_branch
          %254 = sbr.rel (%p252) target = $region48
        $region47: #{tpu_custom_call.1} parent=35 // pred_region
          %255 = dma.done [#allocation6], 256
        $region48: #{tpu_custom_call.1} parent=35 // pred_fallthru
          _
        // Predicated region
        $region49: #{tpu_custom_call.1} parent=35 // pred_check
          %p256 = pneg %p114
        $region50: #{tpu_custom_call.1} parent=35 // pred_check_branch
          %258 = sbr.rel (%p256) target = $region52
        $region51: #{tpu_custom_call.1} parent=35 // pred_region
          %259 = dma.done [#allocation9], 384
        $region52: #{tpu_custom_call.1} parent=35 // pred_fallthru
          _
        %s260 = sand.u32 %s33, 1
        %s261 = scalar_lea.sflag [#allocation3], %s260
        %s262 = sand.u32 %s33, 1
        %s263 = smul.addr %s262, 32
        %s264 = scalar_lea.vmem [#allocation2], %s263
        %p265 = pneg %p46
        %p266 = pneg %p43
        %s267 = sand.u32 %s25, 1
        %s268 = scalar_lea.sflag [#allocation6], %s267
        %s269 = sand.u32 %s59, 1
        %s270 = smul.addr %s269, 192
        %s271 = scalar_lea.vmem [#allocation5], %s270
        %p272 = pneg %p72
        %p273 = pneg %p69
        %p274 = pneg %p93
        %p275 = pneg %p90
        %p276 = pneg %p114
        %p277 = pneg %p111
        %p278 = pneg %p140
        %p279 = pneg %p137
        %s280 = sand.u32 %s127, 1
        %s281 = scalar_lea.sflag [#allocation4], %s280
        %s282 = sand.u32 %s127, 1
        %s283 = smul.addr %s282, 32
        %s284 = scalar_lea.vmem [#allocation10], %s283
        %s285 = smul.u32 2, %s25
        %s286 = smul.u32 2, %s25
        %s287 = smul.u32 2, %s25
        %v288 = vld [vmem:[%s238] sm:$0xff]
        %v289 = vld [vmem:[%s238 + $0x8] sm:$0xff]
        %v290 = vld [vmem:[%s238 + $0x10] sm:$0xf]
        %v291 = vld [vmem:[%s238 + $0x18] sm:$0xf]
        %v292 = vld [vmem:[%s247] sm:$0xff]
        %v293 = vld [vmem:[%s247 + $0x8] sm:$0xff]
        %v294 = vld [vmem:[%s247 + $0x10] sm:$0xf]
        %v295 = vld [vmem:[%s247 + $0x18] sm:$0xf]
        %s296 = scalar_lea.vmem %s247, 32 [#allocation5]
        %v297 = vld [vmem:[%s296] sm:$0xff]
        %v298 = vld [vmem:[%s296 + $0x8] sm:$0xff]
        %v299 = vld [vmem:[%s296 + $0x10] sm:$0xf]
        %v300 = vld [vmem:[%s296 + $0x18] sm:$0xf]
        %s301 = scalar_lea.vmem %s247, 64 [#allocation5]
        %v302 = vld [vmem:[%s301] sm:$0xff]
        %v303 = vld [vmem:[%s301 + $0x8] sm:$0xff]
        %v304 = vld [vmem:[%s301 + $0x10] sm:$0xf]
        %v305 = vld [vmem:[%s301 + $0x18] sm:$0xf]
        %s306 = scalar_lea.vmem %s247, 96 [#allocation5]
        %v307 = vld [vmem:[%s306] sm:$0xff]
        %v308 = vld [vmem:[%s306 + $0x8] sm:$0xff]
        %v309 = vld [vmem:[%s306 + $0x10] sm:$0xf]
        %v310 = vld [vmem:[%s306 + $0x18] sm:$0xf]
        %s311 = scalar_lea.vmem %s247, 128 [#allocation5]
        %v312 = vld [vmem:[%s311] sm:$0xff]
        %v313 = vld [vmem:[%s311 + $0x8] sm:$0xff]
        %v314 = vld [vmem:[%s311 + $0x10] sm:$0xf]
        %v315 = vld [vmem:[%s311 + $0x18] sm:$0xf]
        %s316 = scalar_lea.vmem %s247, 160 [#allocation5]
        %v317 = vld [vmem:[%s316] sm:$0xff]
        %v318 = vld [vmem:[%s316 + $0x8] sm:$0xff]
        %v319 = vld [vmem:[%s316 + $0x10] sm:$0xf]
        %v320 = vld [vmem:[%s316 + $0x18] sm:$0xf]
        %v321 = vmul.f32 %v292, %v288
        %v322 = vmul.f32 %v293, %v289
        %v323 = vmul.f32 %v294, %v290
        %v324 = vmul.f32 %v295, %v291
        %v325 = vmul.f32 %v297, %v288
        %v326 = vmul.f32 %v298, %v289
        %v327 = vmul.f32 %v299, %v290
        %v328 = vmul.f32 %v300, %v291
        %vm333 = vcmask 1043456
        %v334 = vrot.slane %v325, 4
        %v335 = vrot.slane %v326, 4
        %v336 = vrot.slane %v327, 4
        %v337 = vsel %vm333, %v334, %v336
        %v338 = vrot.slane %v328, 4
        %v339 = vsel %vm333, %v335, %v338
        %v344 = vsel %vm333, %v323, %v334
        %v345 = vsel %vm333, %v324, %v335
        %v346 = vld [vmem:[#allocation7] sm:$0xff]
        %v347 = vld [vmem:[#allocation7 + $0x8] sm:$0xf]
        %vm348 = vcmask 195584
        %v350 = vsel %vm348, %v346, 0
        %v353 = vsel %vm348, %v347, 0
        %355 = vmatprep.subr.mxu0 %v322
        %356 = vmatpush1.msra.mxu0 %v321
        %357 = vmatprep.subr.mxu0 %v345
        %358 = vmatpush1.msra.mxu0 %v344
        %359 = vmatprep.subr.mxu0 %v339
        %360 = vmatpush1.msra.mxu0 %v337
        %361 = vmatprep.subr.mxu0 0.0
        %362 = vmatpush1.msra.mxu0 0.0
        %363 = vmatprep.subr.mxu0 0.0
        %364 = vmatpush1.msra.mxu0 0.0
        %365 = vmatprep.subr.mxu0 0.0
        %366 = vmatpush1.msra.mxu0 0.0
        %367 = vmatprep.subr.mxu0 0.0
        %368 = vmatpush1.msra.mxu0 0.0
        %369 = vmatprep.subr.mxu0 0.0
        %370 = vmatpush1.msra.mxu0 0.0
        %371 = vmatprep.subr.mxu0 0.0
        %372 = vmatpush1.msra.mxu0 0.0
        %373 = vmatprep.subr.mxu0 0.0
        %374 = vmatpush1.msra.mxu0 0.0
        %375 = vmatprep.subr.mxu0 0.0
        %376 = vmatpush1.msra.mxu0 0.0
        %377 = vmatprep.subr.mxu0 0.0
        %378 = vmatpush1.msra.mxu0 0.0
        %379 = vmatprep.subr.mxu0 0.0
        %380 = vmatpush1.msra.mxu0 0.0
        %381 = vmatprep.subr.mxu0 0.0
        %382 = vmatpush1.msra.mxu0 0.0
        %383 = vmatprep.subr.mxu0 0.0
        %384 = vmatpush1.msra.mxu0 0.0
        %385 = vmatprep.subr.mxu0 0.0
        %386 = vmatpush1.msra.mxu0 0.0
        %387 = vmatprep.subr.mxu0 0.0
        %388 = vmatpush1.msra.mxu0 0.0
        %389 = vmatprep.subr.mxu0 0.0
        %390 = vmatpush1.msra.mxu0 0.0
        %391 = vmatprep.subr.mxu0 0.0
        %392 = vmatpush1.msra.mxu0 0.0
        %393 = vmatprep.subr.mxu0 0.0
        %394 = vmatpush1.msra.mxu0 0.0
        %395 = vmatprep.subr.mxu0 0.0
        %396 = vmatpush1.msra.mxu0 0.0
        %397 = vmatprep.subr.mxu0 0.0
        %398 = vmatpush1.msra.mxu0 0.0
        %399 = vmatprep.subr.mxu0 0.0
        %400 = vmatpush1.msra.mxu0 0.0
        %401 = vmatprep.subr.mxu0 0.0
        %402 = vmatpush1.msra.mxu0 0.0
        %403 = vmatprep.subr.mxu0 0.0
        %404 = vmatpush1.msra.mxu0 0.0
        %405 = vmatprep.subr.mxu0 0.0
        %406 = vmatpush1.msra.mxu0 0.0
        %407 = vmatprep.subr.mxu0 0.0
        %408 = vmatpush1.msra.mxu0 0.0
        %409 = vmatprep.subr.mxu0 0.0
        %410 = vmatpush1.msra.mxu0 0.0
        %411 = vmatprep.subr.mxu0 0.0
        %412 = vmatpush1.msra.mxu0 0.0
        %413 = vmatprep.subr.mxu0 0.0
        %414 = vmatpush1.msra.mxu0 0.0
        %415 = vmatprep.subr.mxu0 0.0
        %416 = vmatpush1.msra.mxu0 0.0
        %417 = vmatprep.subr.mxu0 0.0
        %418 = vmatpush1.msra.mxu0 0.0
        %419 = vmatprep.mubr.f32.mxu0 0.0
        %420 = vmatmul.mubr.f32.gmra.mrb[0].mxu0 %v350
        %v421 = vpop.f32.mrb[0].mxu0
        %v422 = vadd.f32 0.0, %v421
        %v423 = vpop.f32.mrb[0].mxu0
        %v424 = vadd.f32 0.0, %v423
        %425 = vmatprep.mubr.f32.mxu0 0.0
        %426 = vmatmul.mubr.f32.gmra.mrb[0].mxu0 %v353
        %v427 = vpop.f32.mrb[0].mxu0
        %v428 = vadd.f32 0.0, %v427
        %v429 = vpop.f32.mrb[0].mxu0
        %v430 = vadd.f32 0.0, %v429
        %431 = vdwg.mxu0
        %v432 = vmul.f32 %v302, %v422
        %v433 = vmul.f32 %v303, %v424
        %v434 = vmul.f32 %v304, %v428
        %v435 = vmul.f32 %v305, %v430
        %v436 = vmul.f32 %v307, %v422
        %v437 = vmul.f32 %v308, %v424
        %v438 = vmul.f32 %v309, %v428
        %v439 = vmul.f32 %v310, %v430
        %v444 = vrot.slane %v436, 4
        %v445 = vrot.slane %v437, 4
        %v446 = vrot.slane %v438, 4
        %v447 = vsel %vm333, %v444, %v446
        %v448 = vrot.slane %v439, 4
        %v449 = vsel %vm333, %v445, %v448
        %v454 = vsel %vm333, %v434, %v444
        %v455 = vsel %vm333, %v435, %v445
        %v456 = vld [vmem:[#allocation8] sm:$0xff]
        %v457 = vld [vmem:[#allocation8 + $0x8] sm:$0xff]
        %v458 = vld [vmem:[#allocation8 + $0x10] sm:$0xff]
        %v460 = vsel %vm348, %v456, 0
        %v463 = vsel %vm348, %v457, 0
        %v466 = vsel %vm348, %v458, 0
        %468 = vmatprep.subr.mxu0 %v433
        %469 = vmatpush1.msra.mxu0 %v432
        %470 = vmatprep.subr.mxu0 %v455
        %471 = vmatpush1.msra.mxu0 %v454
        %472 = vmatprep.subr.mxu0 %v449
        %473 = vmatpush1.msra.mxu0 %v447
        %474 = vmatprep.subr.mxu0 0.0
        %475 = vmatpush1.msra.mxu0 0.0
        %476 = vmatprep.subr.mxu0 0.0
        %477 = vmatpush1.msra.mxu0 0.0
        %478 = vmatprep.subr.mxu0 0.0
        %479 = vmatpush1.msra.mxu0 0.0
        %480 = vmatprep.subr.mxu0 0.0
        %481 = vmatpush1.msra.mxu0 0.0
        %482 = vmatprep.subr.mxu0 0.0
        %483 = vmatpush1.msra.mxu0 0.0
        %484 = vmatprep.subr.mxu0 0.0
        %485 = vmatpush1.msra.mxu0 0.0
        %486 = vmatprep.subr.mxu0 0.0
        %487 = vmatpush1.msra.mxu0 0.0
        %488 = vmatprep.subr.mxu0 0.0
        %489 = vmatpush1.msra.mxu0 0.0
        %490 = vmatprep.subr.mxu0 0.0
        %491 = vmatpush1.msra.mxu0 0.0
        %492 = vmatprep.subr.mxu0 0.0
        %493 = vmatpush1.msra.mxu0 0.0
        %494 = vmatprep.subr.mxu0 0.0
        %495 = vmatpush1.msra.mxu0 0.0
        %496 = vmatprep.subr.mxu0 0.0
        %497 = vmatpush1.msra.mxu0 0.0
        %498 = vmatprep.subr.mxu0 0.0
        %499 = vmatpush1.msra.mxu0 0.0
        %500 = vmatprep.subr.mxu0 0.0
        %501 = vmatpush1.msra.mxu0 0.0
        %502 = vmatprep.subr.mxu0 0.0
        %503 = vmatpush1.msra.mxu0 0.0
        %504 = vmatprep.subr.mxu0 0.0
        %505 = vmatpush1.msra.mxu0 0.0
        %506 = vmatprep.subr.mxu0 0.0
        %507 = vmatpush1.msra.mxu0 0.0
        %508 = vmatprep.subr.mxu0 0.0
        %509 = vmatpush1.msra.mxu0 0.0
        %510 = vmatprep.subr.mxu0 0.0
        %511 = vmatpush1.msra.mxu0 0.0
        %512 = vmatprep.subr.mxu0 0.0
        %513 = vmatpush1.msra.mxu0 0.0
        %514 = vmatprep.subr.mxu0 0.0
        %515 = vmatpush1.msra.mxu0 0.0
        %516 = vmatprep.subr.mxu0 0.0
        %517 = vmatpush1.msra.mxu0 0.0
        %518 = vmatprep.subr.mxu0 0.0
        %519 = vmatpush1.msra.mxu0 0.0
        %520 = vmatprep.subr.mxu0 0.0
        %521 = vmatpush1.msra.mxu0 0.0
        %522 = vmatprep.subr.mxu0 0.0
        %523 = vmatpush1.msra.mxu0 0.0
        %524 = vmatprep.subr.mxu0 0.0
        %525 = vmatpush1.msra.mxu0 0.0
        %526 = vmatprep.subr.mxu0 0.0
        %527 = vmatpush1.msra.mxu0 0.0
        %528 = vmatprep.subr.mxu0 0.0
        %529 = vmatpush1.msra.mxu0 0.0
        %530 = vmatprep.subr.mxu0 0.0
        %531 = vmatpush1.msra.mxu0 0.0
        %532 = vmatprep.mubr.f32.mxu0 0.0
        %533 = vmatmul.mubr.f32.gmra.mrb[0].mxu0 %v460
        %v534 = vpop.f32.mrb[0].mxu0
        %v535 = vadd.f32 0.0, %v534
        %v536 = vpop.f32.mrb[0].mxu0
        %v537 = vadd.f32 0.0, %v536
        %538 = vmatprep.mubr.f32.mxu0 0.0
        %539 = vmatmul.mubr.f32.gmra.mrb[0].mxu0 %v463
        %v540 = vpop.f32.mrb[0].mxu0
        %v541 = vadd.f32 0.0, %v540
        %v542 = vpop.f32.mrb[0].mxu0
        %v543 = vadd.f32 0.0, %v542
        %544 = vmatprep.mubr.f32.mxu0 0.0
        %545 = vmatmul.mubr.f32.gmra.mrb[0].mxu0 %v466
        %v546 = vpop.f32.mrb[0].mxu0
        %v547 = vadd.f32 0.0, %v546
        %v548 = vpop.f32.mrb[0].mxu0
        %v549 = vadd.f32 0.0, %v548
        %550 = vdwg.mxu0
        %v551 = vmul.f32 %v312, %v535
        %v552 = vmul.f32 %v313, %v537
        %v553 = vmul.f32 %v314, %v541
        %v554 = vmul.f32 %v315, %v543
        %v559 = vrot.slane %v541, 4
        %v560 = vrot.slane %v547, 4
        %v561 = vsel %vm333, %v559, %v560
        %v562 = vrot.slane %v543, 4
        %v563 = vrot.slane %v549, 4
        %v564 = vsel %vm333, %v562, %v563
        %v569 = vmul.f32 %v317, %v561
        %v570 = vmul.f32 %v318, %v564
        %v571 = vmul.f32 %v319, %v560
        %v572 = vmul.f32 %v320, %v563
        %v573 = vadd.f32 %v551, %v569
        %v574 = vadd.f32 %v552, %v570
        %v575 = vadd.f32 %v553, %v571
        %v576 = vadd.f32 %v554, %v572
        %577 = vst [vmem:[%s284] sm:$0xff] %v573
        %578 = vst [vmem:[%s284 + $0x8] sm:$0xff] %v574
        %579 = vst [vmem:[%s284 + $0x10] sm:$0xf] %v575
        %580 = vst [vmem:[%s284 + $0x18] sm:$0xf] %v576
        %s581 = sand.u32 %s127, 1
        %s582 = scalar_lea.sflag [#allocation4], %s581
        %s583 = sand.u32 %s127, 1
        %s584 = smul.addr %s583, 32
        %s585 = scalar_lea.vmem [#allocation10], %s584
        // Predicated region
        $region53: #{tpu_custom_call.1} parent=35 // pred_check
          %p586 = pneg %p137
        $region54: #{tpu_custom_call.1} parent=35 // pred_check_branch
          %588 = sbr.rel (%p586) target = $region56
        $region55: #{tpu_custom_call.1} parent=35 // pred_region
          %s589 = smul.u32 2, %s25
          %s591 = ssub.s32 512, 512
          %592 = vsyncadd %s582, %s591
          %s593 = smul.addr %s589, 128
          %s594 = scalar_lea.hbm %s4, %s593
          %s595 = sshll.u32 %s585, 4
          %s596 = int_to_ptr.vmem [resolvable:$true] %s595
          %601 = dma.vmem_to_hbm [thread:$0]  %s596, 512, %s594, %s582, 256, 512, 16
        $region56: #{tpu_custom_call.1} parent=35 // pred_fallthru
          _
      $region36: #{tpu_custom_call.1} parent=5 // pred_fallthru
        _
      %p602 = scmp.le.s32.totalorder 2, %s20
      // Predicated region
      $region57: #{tpu_custom_call.1} parent=5 // pred_check
        %p603 = pneg %p602
      $region58: #{tpu_custom_call.1} parent=5 // pred_check_branch
        %605 = sbr.rel (%p603) target = $region60
      $region59: #{tpu_custom_call.1} parent=5 // pred_region
        %s606 = ssub.s32 %s20, 2
        // Predicated region
        $region61: #{tpu_custom_call.1} parent=59 // pred_check
          %p607 = pneg %p143
        $region62: #{tpu_custom_call.1} parent=59 // pred_check_branch
          %609 = sbr.rel (%p607) target = $region64
        $region63: #{tpu_custom_call.1} parent=59 // pred_region
          %s610 = sand.u32 %s128, 1
          %s611 = scalar_lea.sflag [#allocation4], %s610
          %s612 = sand.u32 %s128, 1
          %s613 = smul.addr %s612, 32
          %s614 = scalar_lea.vmem [#allocation10], %s613
          %615 = dma.done %s611, 512
        $region64: #{tpu_custom_call.1} parent=59 // pred_fallthru
          _
      $region60: #{tpu_custom_call.1} parent=5 // pred_fallthru
        _
    $region6: #{tpu_custom_call.1} parent=1 // loop_footer
      %s24 = sadd.s32 1, %s20
    $region7: #{tpu_custom_call.1} parent=1 // loop_footer_branch
      %19 = sbr.rel target = $region3
    $region8: #{tpu_custom_call.1} parent=1 // loop_exit
      _
    %616 = vsyncpa [#allocation3], 1
    %s617 = scalar_lea.sflag [#allocation3], 1
    %618 = vsyncpa %s617, 1
    %619 = vsyncpa [#allocation6], 1
    %s620 = scalar_lea.sflag [#allocation6], 1
    %621 = vsyncpa %s620, 1
    %622 = vsyncpa [#allocation9], 1
    %623 = vsyncpa [#allocation4], 1
    %s624 = scalar_lea.sflag [#allocation4], 1
    %625 = vsyncpa %s624, 1

</llo_original>
